<compile_context>
chip_gen: v6e
topology: v6e:2x2x1
jax: 0.10.0
libtpu: 0.0.40
codegen_flags: <defaults>
</compile_context>

<pallas_src>
import functools

import jax
import jax.numpy as jnp
from jax import lax
from jax.experimental import pallas as pl
from jax.experimental.pallas import tpu as pltpu

BN_EPS = 1e-5


def _round_up(x, m):
    return ((x + m - 1) // m) * m


def pzy_kernel(y_ref, w1_ref, w2_ref, bnp_ref, b2_ref, out_ref,
               sc0_ref, sc1_ref, *, batch, block_b, zy_dim):
    phase = pl.program_id(0)          # 0: accumulate BN stats, 1: apply + project
    tile = pl.program_id(1)
    n_tiles = pl.num_programs(1)

    # fc1 (bias-free Linear), bf16 x bf16 -> f32 acc.  Recomputed in both
    # phases: K = y_dim is tiny, so recompute beats staging `h` through HBM.
    h = jnp.dot(y_ref[...], w1_ref[...], preferred_element_type=jnp.float32)

    @pl.when(phase == 0)
    def _stats_pass():
        @pl.when(tile == 0)
        def _init():
            sc0_ref[...] = jnp.zeros_like(sc0_ref)   # running sum
            sc1_ref[...] = jnp.zeros_like(sc1_ref)   # running sum of squares

        if batch % block_b == 0:
            hm = h                                   # no ragged tile: mask compiled out
        else:
            row = tile * block_b + lax.broadcasted_iota(jnp.int32, h.shape, 0)
            hm = jnp.where(row < batch, h, 0.0)
        sc0_ref[...] += jnp.sum(hm, axis=0, keepdims=True)
        sc1_ref[...] += jnp.sum(hm * hm, axis=0, keepdims=True)

        @pl.when(tile == n_tiles - 1)
        def _finalize():
            inv_n = 1.0 / batch
            mean = sc0_ref[...] * inv_n
            var = sc1_ref[...] * inv_n - mean * mean          # biased (training) var
            inv_std = lax.rsqrt(var + BN_EPS)
            bnp = bnp_ref[...]
            gamma = bnp[0:1, :]
            beta = bnp[1:2, :]
            s = gamma * inv_std                               # fold BN affine
            t = beta - mean * s
            sc0_ref[...] = s                                  # reuse scratch: scale
            sc1_ref[...] = t                                  #                shift

    @pl.when(phase == 1)
    def _apply_pass():
        hb = jnp.maximum(h * sc0_ref[...] + sc1_ref[...], 0.0)     # BN + ReLU (f32)
        # fused fc21|fc22, lane-dense (zero-padded to 128 lanes), bf16 MXU feed.
        z = jnp.dot(hb.astype(w2_ref.dtype), w2_ref[...],
                    preferred_element_type=jnp.float32) + b2_ref[...]
        # lanes [0, zy)   -> zy_loc   (identity)
        # lanes >= zy     -> zy_scale (softplus + 1e-7); padding lanes land here
        #                    too but are sliced off in the wrapper.
        col = lax.broadcasted_iota(jnp.int32, z.shape, 1)
        sp = jnp.maximum(z, 0.0) + jnp.log1p(jnp.exp(-jnp.abs(z)))  # stable softplus
        out_ref[...] = jnp.where(col >= zy_dim, sp + 1e-7, z)


def pzy_forward(y, w1, gamma, beta, w21, b21, w22, b22, *, block_b=1024):
    """pzy.forward.  Weights use the PyTorch [out, in] layout; biases are 1-D."""
    B, y_dim = y.shape
    zy = w1.shape[0]

    # ---- layout plumbing (all in the wrapper, no in-kernel compute) ---------
    out_cols = 2 * zy
    padded = _round_up(max(out_cols, 128), 128)          # lane-dense output slab

    w2 = jnp.concatenate([w21.T, w22.T], axis=1)                       # [zy, 2*zy]
    w2 = jnp.pad(w2, ((0, 0), (0, padded - out_cols)))
    b2 = jnp.concatenate([b21.reshape(1, -1), b22.reshape(1, -1)], axis=1)
    b2 = jnp.pad(b2, ((0, 0), (0, padded - out_cols))).astype(jnp.float32)
    bnp = jnp.stack([gamma.reshape(-1), beta.reshape(-1)]).astype(jnp.float32)  # [2, zy]

    # bf16 MXU feeds; f32 accumulation + f32 elementwise inside the kernel.
    y_b = y.astype(jnp.bfloat16)
    w1_b = w1.T.astype(jnp.bfloat16)                                   # [y_dim, zy]
    w2_b = w2.astype(jnp.bfloat16)

    tb = min(_round_up(B, 8), _round_up(block_b, 8))     # batch tile (multiple of 8)
    n_tiles = pl.cdiv(B, tb)

    kernel = functools.partial(pzy_kernel, batch=B, block_b=tb, zy_dim=zy)

    grid_spec = pltpu.PrefetchScalarGridSpec(
        num_scalar_prefetch=0,
        grid=(2, n_tiles),                    # (phase, batch tile); phase 0 = BN stats
        in_specs=[
            pl.BlockSpec((tb, y_dim), lambda p, i: (i, 0)),     # y tile
            pl.BlockSpec((y_dim, zy), lambda p, i: (0, 0)),     # W1   (resident)
            pl.BlockSpec((zy, padded), lambda p, i: (0, 0)),    # W21|W22 fused (resident)
            pl.BlockSpec((2, zy), lambda p, i: (0, 0)),         # gamma/beta packed
            pl.BlockSpec((1, padded), lambda p, i: (0, 0)),     # b21|b22 fused
        ],
        # phase 0 never touches the output: block index stays 0 there, so each
        # output block is flushed exactly once, after phase 1 fully writes it.
        out_specs=pl.BlockSpec((tb, padded), lambda p, i: (i * p, 0)),
        scratch_shapes=[pltpu.VMEM((1, zy), jnp.float32),   # sum   -> BN scale
                        pltpu.VMEM((1, zy), jnp.float32)],  # sumsq -> BN shift
    )

    out = pl.pallas_call(
        kernel,
        out_shape=jax.ShapeDtypeStruct((B, padded), jnp.float32),
        grid_spec=grid_spec,
        compiler_params=pltpu.CompilerParams(
            # batch tiles carry the *global* BatchNorm reduction via scratch,
            # so both axes must stay sequential.
            dimension_semantics=("arbitrary", "arbitrary")),
    )(y_b, w1_b, w2_b, bnp, b2)

    return out[:, :zy], out[:, zy:2 * zy]


def xavier_uniform(key, fan_out, fan_in):
    # matches torch.nn.init.xavier_uniform_ on a [out, in] weight
    bound = (6.0 / (fan_in + fan_out)) ** 0.5
    return jax.random.uniform(key, (fan_out, fan_in), jnp.float32, -bound, bound)


if __name__ == "__main__":
    B, y_dim, zy_dim = 64, 8, 32

    key = jax.random.PRNGKey(0)
    k_y, k_w1, k_w21, k_w22 = jax.random.split(key, 4)

    y = jax.random.normal(k_y, (B, y_dim), jnp.float32)

    w1 = xavier_uniform(k_w1, zy_dim, y_dim)       # [zy, y]
    gamma = jnp.ones((zy_dim,), jnp.float32)       # BatchNorm1d weight init
    beta = jnp.zeros((zy_dim,), jnp.float32)       # BatchNorm1d bias init
    w21 = xavier_uniform(k_w21, zy_dim, zy_dim)
    b21 = jnp.zeros((zy_dim,), jnp.float32)
    w22 = xavier_uniform(k_w22, zy_dim, zy_dim)
    b22 = jnp.zeros((zy_dim,), jnp.float32)

    # block_b=16 -> 4 batch tiles, exercising the cross-tile BN accumulation.
    fwd = jax.jit(functools.partial(pzy_forward, block_b=16))
    zy_loc, zy_scale = fwd(y, w1, gamma, beta, w21, b21, w22, b22)
    jax.block_until_ready((zy_loc, zy_scale))

    # Also exercise the single-tile path (whole batch in one tile).
    fwd1 = jax.jit(pzy_forward)
    zy_loc1, zy_scale1 = fwd1(y, w1, gamma, beta, w21, b21, w22, b22)
    jax.block_until_ready((zy_loc1, zy_scale1))

    # --- reference 1: exact module semantics (all f32) -----------------------
    h = y @ w1.T
    m = h.mean(0, keepdims=True)
    v = ((h - m) ** 2).mean(0, keepdims=True)
    hb = jnp.maximum((h - m) / jnp.sqrt(v + BN_EPS) * gamma + beta, 0.0)
    loc_f32 = hb @ w21.T + b21
    scale_f32 = jax.nn.softplus(hb @ w22.T + b22) + 1e-7

    # --- reference 2: same math with bf16 MXU feeds (matches kernel dtypes) --
    hq = jnp.dot(y.astype(jnp.bfloat16), w1.T.astype(jnp.bfloat16),
                 preferred_element_type=jnp.float32)
    mq = hq.mean(0, keepdims=True)
    vq = ((hq - mq) ** 2).mean(0, keepdims=True)
    hbq = jnp.maximum((hq - mq) * lax.rsqrt(vq + BN_EPS) * gamma + beta, 0.0)
    hbq16 = hbq.astype(jnp.bfloat16)
    loc_bf = jnp.dot(hbq16, w21.T.astype(jnp.bfloat16),
                     preferred_element_type=jnp.float32) + b21
    scale_bf = jax.nn.softplus(
        jnp.dot(hbq16, w22.T.astype(jnp.bfloat16),
                preferred_element_type=jnp.float32) + b22) + 1e-7

    assert jnp.allclose(zy_loc, loc_bf, atol=1e-2, rtol=1e-2), "zy_loc mismatch (bf16 ref)"
    assert jnp.allclose(zy_scale, scale_bf, atol=1e-2, rtol=1e-2), "zy_scale mismatch (bf16 ref)"
    assert jnp.allclose(zy_loc, loc_f32, atol=5e-2, rtol=5e-2), "zy_loc mismatch (f32 ref)"
    assert jnp.allclose(zy_scale, scale_f32, atol=5e-2, rtol=5e-2), "zy_scale mismatch (f32 ref)"
    assert jnp.allclose(zy_loc1, zy_loc, atol=1e-5, rtol=1e-5), "single-tile path mismatch (loc)"
    assert jnp.allclose(zy_scale1, zy_scale, atol=1e-5, rtol=1e-5), "single-tile path mismatch (scale)"

    print("KERNEL_OK")
</pallas_src>

<mosaic_0001>
module attributes {stable_mosaic.version = 11 : i64} {
  func.func @pzy_kernel(%arg0: i32, %arg1: i32, %arg2: memref<16x8xbf16, #tpu.memory_space<vmem>>, %arg3: memref<8x32xbf16, #tpu.memory_space<vmem>>, %arg4: memref<32x128xbf16, #tpu.memory_space<vmem>>, %arg5: memref<2x32xf32, #tpu.memory_space<vmem>>, %arg6: memref<1x128xf32, #tpu.memory_space<vmem>>, %arg7: memref<16x128xf32, #tpu.memory_space<vmem>>, %arg8: memref<1x32xf32, #tpu.memory_space<vmem>>, %arg9: memref<1x32xf32, #tpu.memory_space<vmem>>) attributes {dimension_semantics = [#tpu.dimension_semantics<arbitrary>, #tpu.dimension_semantics<arbitrary>], iteration_bounds = array<i64: 2, 4>, scalar_prefetch = 0 : i64, scratch_operands = 2 : i64, tpu.core_type = #tpu.core_type<tc>, window_params = [{transform_indices = @transform_0, window_bounds = array<i64: 16, 8>}, {pipeline_mode = #tpu.pipeline_mode<synchronous>, transform_indices = @transform_1, window_bounds = array<i64: 8, 32>}, {pipeline_mode = #tpu.pipeline_mode<synchronous>, transform_indices = @transform_2, window_bounds = array<i64: 32, 128>}, {pipeline_mode = #tpu.pipeline_mode<synchronous>, transform_indices = @transform_3, window_bounds = array<i64: 2, 32>}, {pipeline_mode = #tpu.pipeline_mode<synchronous>, transform_indices = @transform_4, window_bounds = array<i64: 1, 128>}, {transform_indices = @transform_5, window_bounds = array<i64: 16, 128>}]} {
    %c0 = arith.constant 0 : index
    %c0_0 = arith.constant 0 : index
    %0 = vector.load %arg2[%c0, %c0_0] : memref<16x8xbf16, #tpu.memory_space<vmem>>, vector<16x8xbf16>
    %c0_1 = arith.constant 0 : index
    %c0_2 = arith.constant 0 : index
    %1 = vector.load %arg3[%c0_1, %c0_2] : memref<8x32xbf16, #tpu.memory_space<vmem>>, vector<8x32xbf16>
    %cst = arith.constant dense<0.000000e+00> : vector<16x32xf32>
    %2 = tpu.matmul %0, %1, %cst {dimension_numbers = #tpu.dot_dimension_numbers<[1], [0], [0], [1], [0, 0, 1, 1], [], []>} : vector<16x8xbf16>, vector<8x32xbf16>, vector<16x32xf32> -> vector<16x32xf32>
    %c0_i32 = arith.constant 0 : i32
    %3 = arith.cmpi eq, %arg0, %c0_i32 : i32
    %4 = arith.extui %3 : i1 to i32
    %c0_i32_3 = arith.constant 0 : i32
    %5 = arith.cmpi ne, %4, %c0_i32_3 : i32
    scf.if %5 {
      %c0_i32_5 = arith.constant 0 : i32
      %9 = arith.cmpi eq, %arg1, %c0_i32_5 : i32
      %10 = arith.extui %9 : i1 to i32
      %c0_i32_6 = arith.constant 0 : i32
      %11 = arith.cmpi ne, %10, %c0_i32_6 : i32
      scf.if %11 {
        %cst_18 = arith.constant 0.000000e+00 : f32
        %26 = vector.broadcast %cst_18 : f32 to vector<1x32xf32>
        %c0_19 = arith.constant 0 : index
        %c0_20 = arith.constant 0 : index
        %27 = vector.load %arg8[%c0_19, %c0_20] : memref<1x32xf32, #tpu.memory_space<vmem>>, vector<1x32xf32>
        tpu.vector_store %arg8[%c0_19, %c0_20], %26 {strides = array<i32>} : memref<1x32xf32, #tpu.memory_space<vmem>>, vector<1x32xf32>,
        %cst_21 = arith.constant 0.000000e+00 : f32
        %28 = vector.broadcast %cst_21 : f32 to vector<1x32xf32>
        %c0_22 = arith.constant 0 : index
        %c0_23 = arith.constant 0 : index
        %29 = vector.load %arg9[%c0_22, %c0_23] : memref<1x32xf32, #tpu.memory_space<vmem>>, vector<1x32xf32>
        tpu.vector_store %arg9[%c0_22, %c0_23], %28 {strides = array<i32>} : memref<1x32xf32, #tpu.memory_space<vmem>>, vector<1x32xf32>,
      } else {
      }
      %c0_7 = arith.constant 0 : index
      %c0_8 = arith.constant 0 : index
      %12 = vector.load %arg8[%c0_7, %c0_8] : memref<1x32xf32, #tpu.memory_space<vmem>>, vector<1x32xf32>
      %cst_9 = arith.constant dense<0.000000e+00> : vector<32xf32>
      %13 = vector.multi_reduction <add>, %2, %cst_9 [0] : vector<16x32xf32> to vector<32xf32>
      %14 = vector.shape_cast %13 : vector<32xf32> to vector<1x32xf32>
      %15 = arith.addf %12, %14 : vector<1x32xf32>
      %c0_10 = arith.constant 0 : index
      %c0_11 = arith.constant 0 : index
      %16 = vector.load %arg8[%c0_10, %c0_11] : memref<1x32xf32, #tpu.memory_space<vmem>>, vector<1x32xf32>
      tpu.vector_store %arg8[%c0_10, %c0_11], %15 {strides = array<i32>} : memref<1x32xf32, #tpu.memory_space<vmem>>, vector<1x32xf32>,
      %c0_12 = arith.constant 0 : index
      %c0_13 = arith.constant 0 : index
      %17 = vector.load %arg9[%c0_12, %c0_13] : memref<1x32xf32, #tpu.memory_space<vmem>>, vector<1x32xf32>
      %18 = arith.mulf %2, %2 : vector<16x32xf32>
      %cst_14 = arith.constant dense<0.000000e+00> : vector<32xf32>
      %19 = vector.multi_reduction <add>, %18, %cst_14 [0] : vector<16x32xf32> to vector<32xf32>
      %20 = vector.shape_cast %19 : vector<32xf32> to vector<1x32xf32>
      %21 = arith.addf %17, %20 : vector<1x32xf32>
      %c0_15 = arith.constant 0 : index
      %c0_16 = arith.constant 0 : index
      %22 = vector.load %arg9[%c0_15, %c0_16] : memref<1x32xf32, #tpu.memory_space<vmem>>, vector<1x32xf32>
      tpu.vector_store %arg9[%c0_15, %c0_16], %21 {strides = array<i32>} : memref<1x32xf32, #tpu.memory_space<vmem>>, vector<1x32xf32>,
      %c3_i32 = arith.constant 3 : i32
      %23 = arith.cmpi eq, %arg1, %c3_i32 : i32
      %24 = arith.extui %23 : i1 to i32
      %c0_i32_17 = arith.constant 0 : i32
      %25 = arith.cmpi ne, %24, %c0_i32_17 : i32
      scf.if %25 {
        %c0_18 = arith.constant 0 : index
        %c0_19 = arith.constant 0 : index
        %26 = vector.load %arg8[%c0_18, %c0_19] : memref<1x32xf32, #tpu.memory_space<vmem>>, vector<1x32xf32>
        %cst_20 = arith.constant 1.562500e-02 : f32
        %27 = vector.broadcast %cst_20 : f32 to vector<1x32xf32>
        %28 = arith.mulf %26, %27 : vector<1x32xf32>
        %c0_21 = arith.constant 0 : index
        %c0_22 = arith.constant 0 : index
        %29 = vector.load %arg9[%c0_21, %c0_22] : memref<1x32xf32, #tpu.memory_space<vmem>>, vector<1x32xf32>
        %cst_23 = arith.constant 1.562500e-02 : f32
        %30 = vector.broadcast %cst_23 : f32 to vector<1x32xf32>
        %31 = arith.mulf %29, %30 : vector<1x32xf32>
        %32 = arith.mulf %28, %28 : vector<1x32xf32>
        %33 = arith.subf %31, %32 : vector<1x32xf32>
        %cst_24 = arith.constant 9.99999974E-6 : f32
        %34 = vector.broadcast %cst_24 : f32 to vector<1x32xf32>
        %35 = arith.addf %33, %34 : vector<1x32xf32>
        %36 = math.rsqrt %35 : vector<1x32xf32>
        %c0_25 = arith.constant 0 : index
        %c0_26 = arith.constant 0 : index
        %37 = vector.load %arg5[%c0_25, %c0_26] : memref<2x32xf32, #tpu.memory_space<vmem>>, vector<2x32xf32>
        %38 = vector.extract_strided_slice %37 {offsets = [0, 0], sizes = [1, 32], strides = [1, 1]} : vector<2x32xf32> to vector<1x32xf32>
        %39 = vector.extract_strided_slice %37 {offsets = [1, 0], sizes = [1, 32], strides = [1, 1]} : vector<2x32xf32> to vector<1x32xf32>
        %40 = arith.mulf %38, %36 : vector<1x32xf32>
        %41 = arith.mulf %28, %40 : vector<1x32xf32>
        %42 = arith.subf %39, %41 : vector<1x32xf32>
        %c0_27 = arith.constant 0 : index
        %c0_28 = arith.constant 0 : index
        %43 = vector.load %arg8[%c0_27, %c0_28] : memref<1x32xf32, #tpu.memory_space<vmem>>, vector<1x32xf32>
        tpu.vector_store %arg8[%c0_27, %c0_28], %40 {strides = array<i32>} : memref<1x32xf32, #tpu.memory_space<vmem>>, vector<1x32xf32>,
        %c0_29 = arith.constant 0 : index
        %c0_30 = arith.constant 0 : index
        %44 = vector.load %arg9[%c0_29, %c0_30] : memref<1x32xf32, #tpu.memory_space<vmem>>, vector<1x32xf32>
        tpu.vector_store %arg9[%c0_29, %c0_30], %42 {strides = array<i32>} : memref<1x32xf32, #tpu.memory_space<vmem>>, vector<1x32xf32>,
      } else {
      }
    } else {
    }
    %c1_i32 = arith.constant 1 : i32
    %6 = arith.cmpi eq, %arg0, %c1_i32 : i32
    %7 = arith.extui %6 : i1 to i32
    %c0_i32_4 = arith.constant 0 : i32
    %8 = arith.cmpi ne, %7, %c0_i32_4 : i32
    scf.if %8 {
      %c0_5 = arith.constant 0 : index
      %c0_6 = arith.constant 0 : index
      %9 = vector.load %arg8[%c0_5, %c0_6] : memref<1x32xf32, #tpu.memory_space<vmem>>, vector<1x32xf32>
      %10 = vector.broadcast %9 : vector<1x32xf32> to vector<16x32xf32>
      %11 = arith.mulf %2, %10 : vector<16x32xf32>
      %c0_7 = arith.constant 0 : index
      %c0_8 = arith.constant 0 : index
      %12 = vector.load %arg9[%c0_7, %c0_8] : memref<1x32xf32, #tpu.memory_space<vmem>>, vector<1x32xf32>
      %13 = vector.broadcast %12 : vector<1x32xf32> to vector<16x32xf32>
      %14 = arith.addf %11, %13 : vector<16x32xf32>
      %cst_9 = arith.constant 0.000000e+00 : f32
      %15 = vector.broadcast %cst_9 : f32 to vector<16x32xf32>
      %16 = arith.maximumf %14, %15 : vector<16x32xf32>
      %17 = arith.truncf %16 : vector<16x32xf32> to vector<16x32xbf16>
      %c0_10 = arith.constant 0 : index
      %c0_11 = arith.constant 0 : index
      %18 = vector.load %arg4[%c0_10, %c0_11] : memref<32x128xbf16, #tpu.memory_space<vmem>>, vector<32x128xbf16>
      %cst_12 = arith.constant dense<0.000000e+00> : vector<16x128xf32>
      %19 = tpu.matmul %17, %18, %cst_12 {dimension_numbers = #tpu.dot_dimension_numbers<[1], [0], [0], [1], [0, 0, 1, 1], [], []>} : vector<16x32xbf16>, vector<32x128xbf16>, vector<16x128xf32> -> vector<16x128xf32>
      %c0_13 = arith.constant 0 : index
      %c0_14 = arith.constant 0 : index
      %20 = vector.load %arg6[%c0_13, %c0_14] : memref<1x128xf32, #tpu.memory_space<vmem>>, vector<1x128xf32>
      %21 = vector.broadcast %20 : vector<1x128xf32> to vector<16x128xf32>
      %22 = arith.addf %19, %21 : vector<16x128xf32>
      %23 = tpu.iota {dimensions = array<i32: 1>} : vector<16x128xi32>
      %cst_15 = arith.constant 0.000000e+00 : f32
      %24 = vector.broadcast %cst_15 : f32 to vector<16x128xf32>
      %25 = arith.maximumf %22, %24 : vector<16x128xf32>
      %26 = math.absf %22 : vector<16x128xf32>
      %cst_16 = arith.constant 0.000000e+00 : f32
      %27 = vector.broadcast %cst_16 : f32 to vector<16x128xf32>
      %28 = arith.subf %27, %26 : vector<16x128xf32>
      %29 = math.exp %28 : vector<16x128xf32>
      %30 = math.log1p %29 : vector<16x128xf32>
      %31 = arith.addf %25, %30 : vector<16x128xf32>
      %c32_i32 = arith.constant 32 : i32
      %32 = vector.broadcast %c32_i32 : i32 to vector<16x128xi32>
      %33 = arith.cmpi sge, %23, %32 : vector<16x128xi32>
      %cst_17 = arith.constant 1.000000e-07 : f32
      %34 = vector.broadcast %cst_17 : f32 to vector<16x128xf32>
      %35 = arith.addf %31, %34 : vector<16x128xf32>
      %36 = arith.select %33, %35, %22 : vector<16x128xi1>, vector<16x128xf32>
      %c0_18 = arith.constant 0 : index
      %c0_19 = arith.constant 0 : index
      %37 = vector.load %arg7[%c0_18, %c0_19] : memref<16x128xf32, #tpu.memory_space<vmem>>, vector<16x128xf32>
      tpu.vector_store %arg7[%c0_18, %c0_19], %36 {strides = array<i32>} : memref<16x128xf32, #tpu.memory_space<vmem>>, vector<16x128xf32>,
    } else {
    }
    return
  }
  func.func @transform_0(%arg0: i32, %arg1: i32) -> (i32, i32) {
    %c0_i32 = arith.constant 0 : i32
    %c0_i32_0 = arith.constant 0 : i32
    return %arg1, %c0_i32 : i32, i32
  }
  func.func @transform_1(%arg0: i32, %arg1: i32) -> (i32, i32) {
    %c0_i32 = arith.constant 0 : i32
    %c0_i32_0 = arith.constant 0 : i32
    %c0_i32_1 = arith.constant 0 : i32
    return %c0_i32, %c0_i32_0 : i32, i32
  }
  func.func @transform_2(%arg0: i32, %arg1: i32) -> (i32, i32) {
    %c0_i32 = arith.constant 0 : i32
    %c0_i32_0 = arith.constant 0 : i32
    %c0_i32_1 = arith.constant 0 : i32
    return %c0_i32, %c0_i32_0 : i32, i32
  }
  func.func @transform_3(%arg0: i32, %arg1: i32) -> (i32, i32) {
    %c0_i32 = arith.constant 0 : i32
    %c0_i32_0 = arith.constant 0 : i32
    %c0_i32_1 = arith.constant 0 : i32
    return %c0_i32, %c0_i32_0 : i32, i32
  }
  func.func @transform_4(%arg0: i32, %arg1: i32) -> (i32, i32) {
    %c0_i32 = arith.constant 0 : i32
    %c0_i32_0 = arith.constant 0 : i32
    %c0_i32_1 = arith.constant 0 : i32
    return %c0_i32, %c0_i32_0 : i32, i32
  }
  func.func @transform_5(%arg0: i32, %arg1: i32) -> (i32, i32) {
    %0 = arith.muli %arg1, %arg0 : i32
    %c0_i32 = arith.constant 0 : i32
    %c0_i32_0 = arith.constant 0 : i32
    return %0, %c0_i32 : i32, i32
  }
}

</mosaic_0001>

<llo_original>
// kernel: pzy_forward.1
$region0: #{pzy_forward.1}
  #allocation0 [shape = 'u32[]', space=smem, size = 0x4, offset = 0x4, fixed_abs, tag = 'smem constant byte address 0x4 - core index']
  #allocation1 [shape = 'u32[144,128]{1,0:T(1,128)}', space=vmem, size = 0x12000, scoped, tag = 'internal scratch']
  #allocation2 [shape = 'f32[1,32]{1,0:T(1,128)}', space=vmem, size = 0x200, scoped, tag = 'scratch operand']
  #allocation3 [shape = 'f32[1,32]{1,0:T(1,128)}', space=vmem, size = 0x200, scoped, tag = 'scratch operand']
  %s0 = inlined_call_operand.vmem [shape: bf16[64,8], index: 0, kind: input, shape index: {}]
  %s1 = inlined_call_operand.vmem [shape: bf16[8,32], index: 1, kind: input, shape index: {}]
  %s2 = inlined_call_operand.vmem [shape: bf16[32,128], index: 2, kind: input, shape index: {}]
  %s3 = inlined_call_operand.vmem [shape: f32[2,32], index: 3, kind: input, shape index: {}]
  %s4 = inlined_call_operand.vmem [shape: f32[1,128], index: 4, kind: input, shape index: {}]
  %s5 = inlined_call_operand.vmem [shape: f32[64,128], index: 5, kind: output, shape index: {}]
  %s6 = sld [smem:[#allocation0]]
  $region69: #{pzy_forward.1} parent=0
    _
  %s8 = ssub.s32 1, %s6
  %s9 = scalar_select 0, %s8, %s6
  loop: start=0, step=1, limit=10
  $region2: #{pzy_forward.1} parent=0 // loop_pre_header
    _
  $region3: #{pzy_forward.1} parent=0 // loop_header
    %s11 = sphi 0, %s15
    %p12 = scmp.ge.s32.totalorder %s11, 10
    %s18 = sphi 0, %s30
    %s19 = sphi 0, %s26
    %s20 = sphi 0, %s18
    %s21 = sphi 0, %s19
    %s22 = sphi 0, %s20
    %s23 = sphi 0, %s21
    %s33 = sphi 0, %s35
    %s36 = sphi 0, %s33
    %s37 = sphi 0, %s36
    %s53 = sphi 0, %s37
    %s57 = sphi 0, %s57
    %s59 = sphi 0, %s57
    %s60 = sphi 0, %s59
    %s74 = sphi 0, %s60
    %s78 = sphi 0, %s78
    %s80 = sphi 0, %s78
    %s81 = sphi 0, %s80
    %s95 = sphi 0, %s81
    %s99 = sphi 0, %s99
    %s101 = sphi 0, %s99
    %s102 = sphi 0, %s101
    %s116 = sphi 0, %s102
    %s120 = sphi 0, %s120
    %s122 = sphi 0, %s120
    %s123 = sphi 0, %s122
    %s137 = sphi 0, %s123
    %s145 = sphi 0, %s147
    %s148 = sphi 0, %s145
    %s149 = sphi 0, %s148
    %s165 = sphi 0, %s149
  $region4: #{pzy_forward.1} parent=0 // loop_header_branch
    %14 = sbr.rel (%p12) target = $region8
  $region5: #{pzy_forward.1} parent=0 // loop_body
    %s16 = ssub.s32 %s11, 1
    %s17 = ssub.s32 %s11, 2
    %s24 = sadd.s32 1, %s19
    %p25 = scmp.ge.s32.totalorder %s24, 4
    %s26 = scalar_select %p25, 0, %s24
    %s27 = sadd.s32 1, %s18
    %s28 = scalar_select %p25, %s27, %s18
    %p29 = scmp.ge.s32.totalorder %s28, 2
    %s30 = scalar_select %p29, 0, %s28
    %s31 = ssub.s32 %s19, %s26
    %p32 = scmp.eq.s32.totalorder %s31, 0
    %s34 = sadd.s32 %s33, 1
    %s35 = scalar_select %p32, %s33, %s34
    %p38 = pneg %p32
    %p39 = scmp.eq.s32.totalorder %s11, 7
    %p40 = por %p38, %p39
    %p41 = scmp.ne.s32.totalorder %s33, %s36
    %p42 = scmp.eq.s32.totalorder %s11, 0
    %p43 = por %p41, %p42
    %p44 = scmp.ne.s32.totalorder %s33, %s36
    %p45 = scmp.eq.s32.totalorder %s16, 7
    %p46 = por %p44, %p45
    %p47 = scmp.ne.s32.totalorder %s36, %s37
    %p48 = scmp.eq.s32.totalorder %s16, 0
    %p49 = por %p47, %p48
    %p50 = scmp.ne.s32.totalorder %s36, %s37
    %p51 = scmp.eq.s32.totalorder %s17, 7
    %p52 = por %p50, %p51
    %p54 = scmp.ne.s32.totalorder %s37, %s53
    %p55 = scmp.eq.s32.totalorder %s17, 0
    %p56 = por %p54, %p55
    %s58 = sadd.s32 %s57, 1
    %p61 = scmp.eq.s32.totalorder %s11, 7
    %p62 = scmp.ne.s32.totalorder %s57, %s59
    %p63 = scmp.eq.s32.totalorder %s11, 0
    %p64 = por %p62, %p63
    %p65 = scmp.ne.s32.totalorder %s57, %s59
    %p66 = scmp.eq.s32.totalorder %s16, 7
    %p67 = por %p65, %p66
    %p68 = scmp.ne.s32.totalorder %s59, %s60
    %p69 = scmp.eq.s32.totalorder %s16, 0
    %p70 = por %p68, %p69
    %p71 = scmp.ne.s32.totalorder %s59, %s60
    %p72 = scmp.eq.s32.totalorder %s17, 7
    %p73 = por %p71, %p72
    %p75 = scmp.ne.s32.totalorder %s60, %s74
    %p76 = scmp.eq.s32.totalorder %s17, 0
    %p77 = por %p75, %p76
    %s79 = sadd.s32 %s78, 1
    %p82 = scmp.eq.s32.totalorder %s11, 7
    %p83 = scmp.ne.s32.totalorder %s78, %s80
    %p84 = scmp.eq.s32.totalorder %s11, 0
    %p85 = por %p83, %p84
    %p86 = scmp.ne.s32.totalorder %s78, %s80
    %p87 = scmp.eq.s32.totalorder %s16, 7
    %p88 = por %p86, %p87
    %p89 = scmp.ne.s32.totalorder %s80, %s81
    %p90 = scmp.eq.s32.totalorder %s16, 0
    %p91 = por %p89, %p90
    %p92 = scmp.ne.s32.totalorder %s80, %s81
    %p93 = scmp.eq.s32.totalorder %s17, 7
    %p94 = por %p92, %p93
    %p96 = scmp.ne.s32.totalorder %s81, %s95
    %p97 = scmp.eq.s32.totalorder %s17, 0
    %p98 = por %p96, %p97
    %s100 = sadd.s32 %s99, 1
    %p103 = scmp.eq.s32.totalorder %s11, 7
    %p104 = scmp.ne.s32.totalorder %s99, %s101
    %p105 = scmp.eq.s32.totalorder %s11, 0
    %p106 = por %p104, %p105
    %p107 = scmp.ne.s32.totalorder %s99, %s101
    %p108 = scmp.eq.s32.totalorder %s16, 7
    %p109 = por %p107, %p108
    %p110 = scmp.ne.s32.totalorder %s101, %s102
    %p111 = scmp.eq.s32.totalorder %s16, 0
    %p112 = por %p110, %p111
    %p113 = scmp.ne.s32.totalorder %s101, %s102
    %p114 = scmp.eq.s32.totalorder %s17, 7
    %p115 = por %p113, %p114
    %p117 = scmp.ne.s32.totalorder %s102, %s116
    %p118 = scmp.eq.s32.totalorder %s17, 0
    %p119 = por %p117, %p118
    %s121 = sadd.s32 %s120, 1
    %p124 = scmp.eq.s32.totalorder %s11, 7
    %p125 = scmp.ne.s32.totalorder %s120, %s122
    %p126 = scmp.eq.s32.totalorder %s11, 0
    %p127 = por %p125, %p126
    %p128 = scmp.ne.s32.totalorder %s120, %s122
    %p129 = scmp.eq.s32.totalorder %s16, 7
    %p130 = por %p128, %p129
    %p131 = scmp.ne.s32.totalorder %s122, %s123
    %p132 = scmp.eq.s32.totalorder %s16, 0
    %p133 = por %p131, %p132
    %p134 = scmp.ne.s32.totalorder %s122, %s123
    %p135 = scmp.eq.s32.totalorder %s17, 7
    %p136 = por %p134, %p135
    %p138 = scmp.ne.s32.totalorder %s123, %s137
    %p139 = scmp.eq.s32.totalorder %s17, 0
    %p140 = por %p138, %p139
    %s141 = smul.u32 %s19, %s18
    %s142 = smul.u32 %s26, %s30
    %s143 = ssub.s32 %s141, %s142
    %p144 = scmp.eq.s32.totalorder %s143, 0
    %s146 = sadd.s32 %s145, 1
    %s147 = scalar_select %p144, %s145, %s146
    %p150 = pneg %p144
    %p151 = scmp.eq.s32.totalorder %s11, 7
    %p152 = por %p150, %p151
    %p153 = scmp.ne.s32.totalorder %s145, %s148
    %p154 = scmp.eq.s32.totalorder %s11, 0
    %p155 = por %p153, %p154
    %p156 = scmp.ne.s32.totalorder %s145, %s148
    %p157 = scmp.eq.s32.totalorder %s16, 7
    %p158 = por %p156, %p157
    %p159 = scmp.ne.s32.totalorder %s148, %s149
    %p160 = scmp.eq.s32.totalorder %s16, 0
    %p161 = por %p159, %p160
    %p162 = scmp.ne.s32.totalorder %s148, %s149
    %p163 = scmp.eq.s32.totalorder %s17, 7
    %p164 = por %p162, %p163
    %p166 = scmp.ne.s32.totalorder %s149, %s165
    %p167 = scmp.eq.s32.totalorder %s17, 0
    %p168 = por %p166, %p167
    %p169 = scmp.le.s32.totalorder 1, %s11
    %p170 = scmp.lt.s32.totalorder %s11, 9
    %p171 = pnand %p169, %p170
    %p172 = pneg %p171
    // Predicated region
    $region9: #{pzy_forward.1} parent=5 // pred_check
      _
    $region10: #{pzy_forward.1} parent=5 // pred_check_branch
      %174 = sbr.rel (%p171) target = $region12
    $region11: #{pzy_forward.1} parent=5 // pred_region
      %s175 = ssub.s32 %s11, 1
      // Predicated region
      $region13: #{pzy_forward.1} parent=11 // pred_check
        %p176 = pneg %p70
      $region14: #{pzy_forward.1} parent=11 // pred_check_branch
        %178 = sbr.rel (%p176) target = $region16
      $region15: #{pzy_forward.1} parent=11 // pred_region
        _
      $region16: #{pzy_forward.1} parent=11 // pred_fallthru
        _
      // Predicated region
      $region17: #{pzy_forward.1} parent=11 // pred_check
        %p179 = pneg %p91
      $region18: #{pzy_forward.1} parent=11 // pred_check_branch
        %181 = sbr.rel (%p179) target = $region20
      $region19: #{pzy_forward.1} parent=11 // pred_region
        _
      $region20: #{pzy_forward.1} parent=11 // pred_fallthru
        _
      // Predicated region
      $region21: #{pzy_forward.1} parent=11 // pred_check
        %p182 = pneg %p112
      $region22: #{pzy_forward.1} parent=11 // pred_check_branch
        %184 = sbr.rel (%p182) target = $region24
      $region23: #{pzy_forward.1} parent=11 // pred_region
        _
      $region24: #{pzy_forward.1} parent=11 // pred_fallthru
        _
      // Predicated region
      $region25: #{pzy_forward.1} parent=11 // pred_check
        %p185 = pneg %p133
      $region26: #{pzy_forward.1} parent=11 // pred_check_branch
        %187 = sbr.rel (%p185) target = $region28
      $region27: #{pzy_forward.1} parent=11 // pred_region
        _
      $region28: #{pzy_forward.1} parent=11 // pred_fallthru
        _
    $region12: #{pzy_forward.1} parent=5 // pred_fallthru
      _
    %p188 = scmp.lt.s32.totalorder %s11, 8
    // Predicated region
    $region29: #{pzy_forward.1} parent=5 // pred_check
      %p189 = pneg %p188
    $region30: #{pzy_forward.1} parent=5 // pred_check_branch
      %191 = sbr.rel (%p189) target = $region32
    $region31: #{pzy_forward.1} parent=5 // pred_region
      // Predicated region
      $region33: #{pzy_forward.1} parent=31 // pred_check
        %p192 = pneg %p43
      $region34: #{pzy_forward.1} parent=31 // pred_check_branch
        %194 = sbr.rel (%p192) target = $region36
      $region35: #{pzy_forward.1} parent=31 // pred_region
        %s195 = smul.u32 2, %s19
        %p196 = scmp.lt.s32.totalorder %s195, 7
        %s197 = scalar_select %p196, %s195, 7
        %s198 = smul.addr %s197, 4
        %s199 = scalar_lea.vmem %s0, %s198
        %s200 = smul.u32 2, %s19
      $region36: #{pzy_forward.1} parent=31 // pred_fallthru
        _
    $region32: #{pzy_forward.1} parent=5 // pred_fallthru
      _
    %p201 = scmp.le.s32.totalorder 1, %s11
    %p202 = scmp.lt.s32.totalorder %s11, 9
    %p203 = pnand %p201, %p202
    %p204 = pneg %p203
    // Predicated region
    $region37: #{pzy_forward.1} parent=5 // pred_check
      _
    $region38: #{pzy_forward.1} parent=5 // pred_check_branch
      %206 = sbr.rel (%p203) target = $region40
    $region39: #{pzy_forward.1} parent=5 // pred_region
      %s207 = ssub.s32 %s11, 1
      %s208 = smul.u32 2, %s21
      %p209 = scmp.lt.s32.totalorder %s208, 7
      %s210 = scalar_select %p209, %s208, 7
      %s211 = smul.addr %s210, 4
      %s212 = scalar_lea.vmem %s0, %s211
      %p213 = pneg %p49
      %p214 = pneg %p46
      %p215 = pneg %p70
      %p216 = pneg %p67
      %p217 = pneg %p91
      %p218 = pneg %p88
      %p219 = pneg %p112
      %p220 = pneg %p109
      %p221 = pneg %p133
      %p222 = pneg %p130
      %p223 = pneg %p161
      %p224 = pneg %p158
      %s225 = smul.u32 %s21, %s20
      %s226 = smul.u32 2, %s225
      %p227 = scmp.lt.s32.totalorder %s226, 7
      %s228 = scalar_select %p227, %s226, 7
      %s229 = smul.addr %s228, 8
      %s230 = scalar_lea.vmem %s5, %s229
      %s231 = smul.u32 2, %s21
      %p232 = scmp.lt.s32.totalorder %s231, 7
      %s233 = scalar_select %p232, %s231, 7
      %s234 = smul.addr %s233, 4
      %s235 = scalar_lea.vmem %s0, %s234
      %s236 = smul.u32 2, %s21
      %s237 = smul.u32 %s21, %s20
      %s238 = smul.u32 2, %s237
      %p239 = scmp.lt.s32.totalorder %s238, 7
      %s240 = scalar_select %p239, %s238, 7
      %s241 = smul.addr %s240, 8
      %s242 = scalar_lea.vmem %s5, %s241
      %s243 = smul.u32 %s21, %s20
      %s244 = smul.u32 2, %s243
      %v246 = vld [vmem:[%s235] sm:$0xf]
      %v247 = vld [vmem:[%s235 + $0x4] sm:$0xf]
      %v248 = vld [vmem:[%s1] sm:$0xf]
      %v251 = vunpack.c.l.b16 %v246
      %v252 = vunpack.c.l.b16 %v247
      %v253 = vpack.c.b16 %v252, %v251
      %vm254 = vcmask 64512
      %v256 = vsel %vm254, %v253, 0
      %vm258 = vcmask 1043456
      %v260 = vsel %vm258, %v248, 0
      %262 = vmatprep.subr.bf16.mxu0 0
      %263 = vmatpush1.bf16.msra.mxu0 0
      %264 = vmatprep.subr.bf16.mxu0 0
      %265 = vmatpush1.bf16.msra.mxu0 0
      %266 = vmatprep.subr.bf16.mxu0 0
      %267 = vmatpush1.bf16.msra.mxu0 0
      %268 = vmatprep.subr.bf16.mxu0 0
      %269 = vmatpush1.bf16.msra.mxu0 0
      %270 = vmatprep.subr.bf16.mxu0 0
      %271 = vmatpush1.bf16.msra.mxu0 0
      %272 = vmatprep.subr.bf16.mxu0 0
      %273 = vmatpush1.bf16.msra.mxu0 0
      %274 = vmatprep.subr.bf16.mxu0 0
      %275 = vmatpush1.bf16.msra.mxu0 0
      %276 = vmatprep.subr.bf16.mxu0 0
      %277 = vmatpush1.bf16.msra.mxu0 %v260
      %278 = vmatprep.subr.bf16.mxu0 0
      %279 = vmatpush2.bf16.msra.mxu0 0
      %280 = vmatprep.subr.bf16.mxu0 0
      %281 = vmatpush2.bf16.msra.mxu0 0
      %282 = vmatprep.subr.bf16.mxu0 0
      %283 = vmatpush2.bf16.msra.mxu0 0
      %284 = vmatprep.subr.bf16.mxu0 0
      %285 = vmatpush2.bf16.msra.mxu0 0
      %286 = vmatprep.subr.bf16.mxu0 0
      %287 = vmatpush2.bf16.msra.mxu0 0
      %288 = vmatprep.subr.bf16.mxu0 0
      %289 = vmatpush2.bf16.msra.mxu0 0
      %290 = vmatprep.subr.bf16.mxu0 0
      %291 = vmatpush2.bf16.msra.mxu0 0
      %292 = vmatprep.subr.bf16.mxu0 0
      %293 = vmatpush2.bf16.msra.mxu0 0
      %294 = vmatprep.mubr.bf16.mxu0 0
      %295 = vmatmul.mubr.bf16.gmra.mxu0 %v256
      %v296 = vpop.f32.mrf.mxu0
      %v297 = vadd.f32 0.0, %v296
      %v298 = vpop.f32.mrf.mxu0
      %v299 = vpop.f32.mrf.mxu0
      %v300 = vadd.f32 0.0, %v299
      %v301 = vpop.f32.mrf.mxu0
      %302 = vdwg.mxu0
      %p303 = scmp.eq.s32.totalorder %s20, 0
      // Predicated region
      $region41: #{pzy_forward.1} parent=39 // pred_check
        %p304 = pneg %p303
      $region42: #{pzy_forward.1} parent=39 // pred_check_branch
        %306 = sbr.rel (%p304) target = $region44
      $region43: #{pzy_forward.1} parent=39 // pred_region
        %p307 = scmp.eq.s32.totalorder %s21, 0
        // Predicated region
        $region45: #{pzy_forward.1} parent=43 // pred_check
          %p308 = pneg %p307
        $region46: #{pzy_forward.1} parent=43 // pred_check_branch
          %310 = sbr.rel (%p308) target = $region48
        $region47: #{pzy_forward.1} parent=43 // pred_region
          %vm311 = vcmask 253952
          %312 = vst.msk [vmem:[#allocation2] sm:$0x1] %vm311, 0.0
          %313 = vst.msk [vmem:[#allocation3] sm:$0x1] %vm311, 0.0
        $region48: #{pzy_forward.1} parent=43 // pred_fallthru
          _
        %v314 = vld [vmem:[#allocation2] sm:$0x1]
        %vm315 = vcmask 261120
        %v316 = vsel %vm315, %v297, 0.0
        %v317 = vsel %vm315, %v300, 0.0
        %v318 = vadd.f32 %v316, %v317
        %v319 = vrot.slane %v318, 4
        %v320 = vadd.f32 %v318, %v319
        %v321 = vrot.slane %v320, 2
        %v322 = vadd.f32 %v320, %v321
        %v323 = vrot.slane %v322, 1
        %v324 = vadd.f32 %v322, %v323
        %v325 = vadd.f32 %v314, %v324
        %vm326 = vcmask 253952
        %327 = vst.msk [vmem:[#allocation2] sm:$0x1] %vm326, %v325
        %v328 = vld [vmem:[#allocation3] sm:$0x1]
        %v329 = vmul.f32 %v297, %v297
        %v330 = vmul.f32 %v300, %v300
        %v331 = vsel %vm315, %v329, 0.0
        %v332 = vsel %vm315, %v330, 0.0
        %v333 = vadd.f32 %v331, %v332
        %v334 = vrot.slane %v333, 4
        %v335 = vadd.f32 %v333, %v334
        %v336 = vrot.slane %v335, 2
        %v337 = vadd.f32 %v335, %v336
        %v338 = vrot.slane %v337, 1
        %v339 = vadd.f32 %v337, %v338
        %v340 = vadd.f32 %v328, %v339
        %341 = vst.msk [vmem:[#allocation3] sm:$0x1] %vm326, %v340
        %p342 = scmp.eq.s32.totalorder %s21, 3
        // Predicated region
        $region49: #{pzy_forward.1} parent=43 // pred_check
          %p343 = pneg %p342
        $region50: #{pzy_forward.1} parent=43 // pred_check_branch
          %345 = sbr.rel (%p343) target = $region52
        $region51: #{pzy_forward.1} parent=43 // pred_region
          %v346 = vld [vmem:[#allocation2] sm:$0x1]
          %v347 = vmul.f32 %v346, 0.015625
          %v348 = vld [vmem:[#allocation3] sm:$0x1]
          %v349 = vmul.f32 %v348, 0.015625
          %v350 = vmul.f32 %v347, %v347
          %v351 = vsub.f32 %v349, %v350
          %v352 = vadd.f32 %v351, 1e-05
          %v353 = vrsqrt.pop %v352
          %v354 = vld [vmem:[%s3] sm:$0x3]
          %v355 = vmul.f32 %v354, %v353
          %v356 = vmul.f32 %v347, %v355
          %v358 = vlaneseq
          %v359 = vshrl.u32 %v358, 7
          %v360 = vsub.s32 0, %v359
          %v361 = vrot.slane %v356, %v360
          %v363 = vsub.f32 %v354, %v361
          %364 = vst.msk [vmem:[#allocation2] sm:$0x1] %vm326, %v355
          %vm365 = vcmask 254977
          %366 = vst.msk [vmem:[#allocation3 - $0x1] sm:$0x2] %vm365, %v363
        $region52: #{pzy_forward.1} parent=43 // pred_fallthru
          _
      $region44: #{pzy_forward.1} parent=39 // pred_fallthru
        _
      %p367 = scmp.eq.s32.totalorder %s20, 1
      // Predicated region
      $region53: #{pzy_forward.1} parent=39 // pred_check
        %p368 = pneg %p367
      $region54: #{pzy_forward.1} parent=39 // pred_check_branch
        %370 = sbr.rel (%p368) target = $region56
      $region55: #{pzy_forward.1} parent=39 // pred_region
        %v371 = vld [vmem:[#allocation2] sm:$0x1]
        %v373 = vlaneseq
        %v374 = vshrl.u32 %v373, 7
        %v375 = vsub.s32 0, %v374
        %v376 = vrot.slane %v371, %v375
        %v378 = vmul.f32 %v297, %v376
        %v379 = vmul.f32 %v300, %v376
        %v380 = vld [vmem:[#allocation3] sm:$0x1]
        %v382 = vlaneseq
        %v383 = vshrl.u32 %v382, 7
        %v384 = vsub.s32 0, %v383
        %v385 = vrot.slane %v380, %v384
        %v387 = vadd.f32 %v378, %v385
        %v388 = vadd.f32 %v379, %v385
        %v389 = vmax.f32 %v387, 0.0
        %v390 = vmax.f32 %v388, 0.0
        %v391 = vpack.c.bf16 %v390, %v389
        %v392 = vld [vmem:[%s2] sm:$0xf]
        %v393 = vld [vmem:[%s2 + $0x4] sm:$0xf]
        %v394 = vld [vmem:[%s2 + $0x8] sm:$0xf]
        %v395 = vld [vmem:[%s2 + $0xc] sm:$0xf]
        %v396 = vld [vmem:[%s4] sm:$0x1]
        %v398 = vlaneseq
        %v399 = vshrl.u32 %v398, 7
        %v400 = vsub.s32 0, %v399
        %v401 = vrot.slane %v396, %v400
        %v407 = vunpack.c.l.b16 %v392
        %v408 = vunpack.c.l.b16 %v393
        %v409 = vunpack.c.l.b16 %v394
        %v410 = vunpack.c.l.b16 %v395
        %v411 = vpack.c.b16 %v408, %v407
        %v412 = vpack.c.b16 %v410, %v409
        %vm415 = vcmask 261120
        %v417 = vsel %vm415, %v391, 0
        %419 = vmatprep.subr.bf16.mxu0 0
        %420 = vmatpush1.bf16.msra.mxu0 0
        %421 = vmatprep.subr.bf16.mxu0 0
        %422 = vmatpush1.bf16.msra.mxu0 0
        %423 = vmatprep.subr.bf16.mxu0 0
        %424 = vmatpush1.bf16.msra.mxu0 0
        %425 = vmatprep.subr.bf16.mxu0 0
        %426 = vmatpush1.bf16.msra.mxu0 0
        %427 = vmatprep.subr.bf16.mxu0 0
        %428 = vmatpush1.bf16.msra.mxu0 0
        %429 = vmatprep.subr.bf16.mxu0 0
        %430 = vmatpush1.bf16.msra.mxu0 0
        %431 = vmatprep.subr.bf16.mxu0 0
        %432 = vmatpush1.bf16.msra.mxu0 %v412
        %433 = vmatprep.subr.bf16.mxu0 0
        %434 = vmatpush1.bf16.msra.mxu0 %v411
        %435 = vmatprep.subr.bf16.mxu0 0
        %436 = vmatpush2.bf16.msra.mxu0 0
        %437 = vmatprep.subr.bf16.mxu0 0
        %438 = vmatpush2.bf16.msra.mxu0 0
        %439 = vmatprep.subr.bf16.mxu0 0
        %440 = vmatpush2.bf16.msra.mxu0 0
        %441 = vmatprep.subr.bf16.mxu0 0
        %442 = vmatpush2.bf16.msra.mxu0 0
        %443 = vmatprep.subr.bf16.mxu0 0
        %444 = vmatpush2.bf16.msra.mxu0 0
        %445 = vmatprep.subr.bf16.mxu0 0
        %446 = vmatpush2.bf16.msra.mxu0 0
        %447 = vmatprep.subr.bf16.mxu0 0
        %448 = vmatpush2.bf16.msra.mxu0 0
        %449 = vmatprep.subr.bf16.mxu0 0
        %450 = vmatpush2.bf16.msra.mxu0 0
        %451 = vmatprep.mubr.bf16.mxu0 0
        %452 = vmatmul.mubr.bf16.gmra.mxu0 %v417
        %v453 = vpop.f32.mrf.mxu0
        %v454 = vadd.f32 %v401, %v453
        %v455 = vpop.f32.mrf.mxu0
        %v456 = vpop.f32.mrf.mxu0
        %v457 = vadd.f32 %v401, %v456
        %v458 = vpop.f32.mrf.mxu0
        %459 = vdwg.mxu0
        %v460 = vlaneseq
        %v461 = vand.u32 %v460, 127
        %v462 = vmax.f32 %v454, 0.0
        %v463 = vmax.f32 %v457, 0.0
        %v464 = vand.u32 2147483647, %v454
        %v465 = vand.u32 2147483647, %v457
        %v466 = vsub.f32 0.0, %v464
        %v467 = vsub.f32 0.0, %v465
        %v468 = vmul.f32 %v466, 1.442695
        %v469 = vpow.pop %v468
        %v470 = vmul.f32 %v467, 1.442695
        %v471 = vpow.pop %v470
        %v472 = vadd.f32 %v469, 1.0
        %v473 = vlog2.pop %v472
        %v474 = vmul.f32 %v473, 0.6931472
        %v475 = vmul.f32 -0.5, %v469
        %v476 = vadd.f32 %v475, 1.0
        %v477 = vmul.f32 %v476, %v469
        %v478 = vand.u32 2147483647, %v469
        %vm479 = vcmp.lt.f32.partialorder %v478, 0.0004427343
        %v480 = vsel %vm479, %v477, %v474
        %v481 = vadd.f32 %v471, 1.0
        %v482 = vlog2.pop %v481
        %v483 = vmul.f32 %v482, 0.6931472
        %v484 = vmul.f32 -0.5, %v471
        %v485 = vadd.f32 %v484, 1.0
        %v486 = vmul.f32 %v485, %v471
        %v487 = vand.u32 2147483647, %v471
        %vm488 = vcmp.lt.f32.partialorder %v487, 0.0004427343
        %v489 = vsel %vm488, %v486, %v483
        %v490 = vadd.f32 %v462, %v480
        %v491 = vadd.f32 %v463, %v489
        %vm492 = vcmp.ge.s32.totalorder %v461, 32
        %v493 = vadd.f32 %v490, 1e-07
        %v494 = vadd.f32 %v491, 1e-07
        %v495 = vsel %vm492, %v493, %v454
        %v496 = vsel %vm492, %v494, %v457
        %497 = vst [vmem:[%s242] sm:$0xff] %v495
        %498 = vst [vmem:[%s242 + $0x8] sm:$0xff] %v496
      $region56: #{pzy_forward.1} parent=39 // pred_fallthru
        _
      %s499 = smul.u32 %s21, %s20
      %s500 = smul.u32 2, %s499
      %p501 = scmp.lt.s32.totalorder %s500, 7
      %s502 = scalar_select %p501, %s500, 7
      %s503 = smul.addr %s502, 8
      %s504 = scalar_lea.vmem %s5, %s503
      // Predicated region
      $region57: #{pzy_forward.1} parent=39 // pred_check
        %p505 = pneg %p158
      $region58: #{pzy_forward.1} parent=39 // pred_check_branch
        %507 = sbr.rel (%p505) target = $region60
      $region59: #{pzy_forward.1} parent=39 // pred_region
        %s508 = smul.u32 %s21, %s20
        %s509 = smul.u32 2, %s508
      $region60: #{pzy_forward.1} parent=39 // pred_fallthru
        _
    $region40: #{pzy_forward.1} parent=5 // pred_fallthru
      _
    %p510 = scmp.le.s32.totalorder 2, %s11
    // Predicated region
    $region61: #{pzy_forward.1} parent=5 // pred_check
      %p511 = pneg %p510
    $region62: #{pzy_forward.1} parent=5 // pred_check_branch
      %513 = sbr.rel (%p511) target = $region64
    $region63: #{pzy_forward.1} parent=5 // pred_region
      %s514 = ssub.s32 %s11, 2
      // Predicated region
      $region65: #{pzy_forward.1} parent=63 // pred_check
        %p515 = pneg %p164
      $region66: #{pzy_forward.1} parent=63 // pred_check_branch
        %517 = sbr.rel (%p515) target = $region68
      $region67: #{pzy_forward.1} parent=63 // pred_region
        %s518 = smul.u32 %s23, %s22
        %s519 = smul.u32 2, %s518
        %p520 = scmp.lt.s32.totalorder %s519, 7
        %s521 = scalar_select %p520, %s519, 7
        %s522 = smul.addr %s521, 8
        %s523 = scalar_lea.vmem %s5, %s522
      $region68: #{pzy_forward.1} parent=63 // pred_fallthru
        _
    $region64: #{pzy_forward.1} parent=5 // pred_fallthru
      _
  $region6: #{pzy_forward.1} parent=0 // loop_footer
    %s15 = sadd.s32 1, %s11
  $region7: #{pzy_forward.1} parent=0 // loop_footer_branch
    %10 = sbr.rel target = $region3
  $region8: #{pzy_forward.1} parent=0 // loop_exit
    _

</llo_original>
